<compile_context>
chip_gen: v7x
topology: tpu7x:2x2x1
jax: 0.10.0
libtpu: 0.0.40
codegen_flags: <defaults>
</compile_context>

<pallas_src>
import jax
import jax.numpy as jnp
from jax.experimental import pallas as pl
from jax.experimental.pallas import tpu as pltpu


def _mlp_embedding_kernel(x_ref, r_ref, w_ref, o_ref):
    # x_ref: (tb, N) f32 dense features
    # r_ref: (N, N*D) bf16 exact 0/1 repeat matrix, r[n, n*D + i] = 1
    # w_ref: (1, N*D) f32 flat projection weights, w[0, n*D + i] = proj_w[n, i]
    # o_ref: (tb, N*D)
    x = x_ref[...]
    # Exact two-term bf16 split of f32 x:  x = x_hi + x_lo + err, |err| <= 2^-18 |x|.
    x_hi = x.astype(jnp.bfloat16)
    x_lo = (x - x_hi.astype(jnp.float32)).astype(jnp.bfloat16)
    r = r_ref[...]
    # Two single-pass bf16 MXU matmuls replicate each x column D times into the
    # flat layout (R is 0/1 so the products are exact into the f32 accumulator).
    x_rep = (jnp.dot(x_hi, r, preferred_element_type=jnp.float32)
             + jnp.dot(x_lo, r, preferred_element_type=jnp.float32))
    # Free VPU scale by the f32 weight row (broadcast over sublanes).
    o_ref[...] = (x_rep * w_ref[...]).astype(o_ref.dtype)


def mlp_embedding(x: jax.Array, proj_w: jax.Array, *,
                  batch_tile: int | None = None,
                  out_dtype=None) -> jax.Array:
    """Pallas implementation of MLPEmbedding.forward.

    Args:
      x: [B, N] dense features (f32).
      proj_w: [N, D] projection weights (f32).
      batch_tile: optional batch tile size (multiple of 8, or == B when B < 8).
        Default targets ~4 MiB output tiles and >= 2 grid blocks.
      out_dtype: output dtype.  Defaults to x.dtype (matches torch); pass
        jnp.bfloat16 to halve the HBM-write-bound traffic when acceptable.

    Returns:
      [B, N * D] embedding.
    """
    B, N = x.shape
    Nw, D = proj_w.shape
    assert N == Nw, "proj_w first dim must equal num_dense_feature"
    ND = N * D
    out_dtype = jnp.dtype(out_dtype or x.dtype)

    # Exact bf16 0/1 repeat matrix: r[n, m*D + i] = (n == m).
    r = jnp.repeat(jnp.eye(N, dtype=jnp.bfloat16), D, axis=1)      # (N, N*D)
    # Flat f32 weight row: w_flat[0, n*D + i] = proj_w[n, i].
    w_flat = proj_w.reshape(1, ND).astype(jnp.float32)

    # ---- Batch tile sizing ------------------------------------------------
    if batch_tile is None:
        # ~4 MiB output tiles: per-step overhead (~0.35 us) stays <10% of the
        # HBM write time on v5e/v6e/v7x while double-buffered tiles stay well
        # under v5e's 16 MiB default scoped VMEM.
        tb = (4 * 1024 * 1024) // max(1, ND * out_dtype.itemsize)
        tb = max(8, min(tb, B))
        if B >= 8:
            tb = max(8, (tb // 8) * 8)
        else:
            tb = B  # block equals the (tiny) full batch dim
        # Keep >= 2 grid blocks when possible so the "parallel" batch axis can
        # shard across v7x's two TensorCores.
        if B >= 16:
            half = -(-B // 2)
            cap = ((half + 7) // 8) * 8
            if cap < B:
                tb = min(tb, cap)
    else:
        tb = batch_tile
    assert tb == B or tb % 8 == 0, "batch_tile must be a multiple of 8 (or == B)"

    n_blocks = pl.cdiv(B, tb)

    # ---- VMEM budget (double-buffered tiles + grid-invariant constants) ----
    out_tile_bytes = tb * ND * out_dtype.itemsize
    x_tile_bytes = tb * N * x.dtype.itemsize
    const_bytes = r.size * r.dtype.itemsize + ND * 4
    vmem_limit = int(min(
        max(2 * (out_tile_bytes + x_tile_bytes + const_bytes) + (2 << 20),
            8 << 20),
        60 << 20))

    cost = pl.CostEstimate(
        flops=2 * 2 * B * N * ND,            # two bf16 matmuls per element
        transcendentals=0,
        bytes_accessed=(B * N * x.dtype.itemsize
                        + const_bytes
                        + B * ND * out_dtype.itemsize),
    )

    return pl.pallas_call(
        _mlp_embedding_kernel,
        out_shape=jax.ShapeDtypeStruct((B, ND), out_dtype),
        grid_spec=pltpu.PrefetchScalarGridSpec(
            num_scalar_prefetch=0,
            grid=(n_blocks,),
            in_specs=[
                pl.BlockSpec((tb, N), lambda i: (i, 0)),
                pl.BlockSpec((N, ND), lambda i: (0, 0)),   # grid-invariant R
                pl.BlockSpec((1, ND), lambda i: (0, 0)),   # grid-invariant w
            ],
            out_specs=pl.BlockSpec((tb, ND), lambda i: (i, 0)),
        ),
        compiler_params=pltpu.CompilerParams(
            dimension_semantics=("parallel",),
            vmem_limit_bytes=vmem_limit,
        ),
        cost_estimate=cost,
    )(x, r, w_flat)


if __name__ == "__main__":
    # Small shapes consistent with the module's forward.
    batch = 8
    num_dense_feature = 16
    embedding_dim = 32

    key = jax.random.PRNGKey(0)
    kx, kw = jax.random.split(key)

    # Deterministic synthetic parameter init matching the module:
    #   proj_w = randn(n, d) * sqrt(2 / (1 + d))
    proj_w = (jax.random.normal(kw, (num_dense_feature, embedding_dim),
                                dtype=jnp.float32)
              * jnp.sqrt(2.0 / (1.0 + embedding_dim)))

    x = jax.random.normal(kx, (batch, num_dense_feature), dtype=jnp.float32)

    out = mlp_embedding(x, proj_w)
    jax.block_until_ready(out)

    # Pure-JAX reference (einsum + reshape, identical to torch semantics).
    ref = jnp.einsum("ni,bn->bni", proj_w, x).reshape(
        batch, num_dense_feature * embedding_dim)
    assert out.shape == (batch, num_dense_feature * embedding_dim)
    assert jnp.allclose(out, ref, atol=1e-5, rtol=1e-5)

    # TODO(synk): state_dict / _load_from_state_dict key-splitting is pure
    # checkpoint bookkeeping and has no forward-pass / Pallas equivalent.
    print("KERNEL_OK")
</pallas_src>

<mosaic_0001>
module attributes {stable_mosaic.version = 11 : i64} {
  func.func @_mlp_embedding_kernel(%arg0: i32, %arg1: memref<8x16xf32, #tpu.memory_space<vmem>>, %arg2: memref<16x512xbf16, #tpu.memory_space<vmem>>, %arg3: memref<1x512xf32, #tpu.memory_space<vmem>>, %arg4: memref<8x512xf32, #tpu.memory_space<vmem>>) attributes {dimension_semantics = [#tpu.dimension_semantics<parallel>], iteration_bounds = array<i64: 1>, scalar_prefetch = 0 : i64, scratch_operands = 0 : i64, tpu.core_type = #tpu.core_type<tc>, window_params = [{transform_indices = @transform_0, window_bounds = array<i64: 8, 16>}, {pipeline_mode = #tpu.pipeline_mode<synchronous>, transform_indices = @transform_1, window_bounds = array<i64: 16, 512>}, {pipeline_mode = #tpu.pipeline_mode<synchronous>, transform_indices = @transform_2, window_bounds = array<i64: 1, 512>}, {transform_indices = @transform_3, window_bounds = array<i64: 8, 512>}]} {
    %c0 = arith.constant 0 : index
    %c0_0 = arith.constant 0 : index
    %0 = vector.load %arg1[%c0, %c0_0] : memref<8x16xf32, #tpu.memory_space<vmem>>, vector<8x16xf32>
    %1 = arith.truncf %0 : vector<8x16xf32> to vector<8x16xbf16>
    %2 = arith.extf %1 : vector<8x16xbf16> to vector<8x16xf32>
    %3 = arith.subf %0, %2 : vector<8x16xf32>
    %4 = arith.truncf %3 : vector<8x16xf32> to vector<8x16xbf16>
    %c0_1 = arith.constant 0 : index
    %c0_2 = arith.constant 0 : index
    %5 = vector.load %arg2[%c0_1, %c0_2] : memref<16x512xbf16, #tpu.memory_space<vmem>>, vector<16x512xbf16>
    %cst = arith.constant dense<0.000000e+00> : vector<8x512xf32>
    %6 = tpu.matmul %1, %5, %cst {dimension_numbers = #tpu.dot_dimension_numbers<[1], [0], [0], [1], [0, 0, 1, 1], [], []>} : vector<8x16xbf16>, vector<16x512xbf16>, vector<8x512xf32> -> vector<8x512xf32>
    %cst_3 = arith.constant dense<0.000000e+00> : vector<8x512xf32>
    %7 = tpu.matmul %4, %5, %cst_3 {dimension_numbers = #tpu.dot_dimension_numbers<[1], [0], [0], [1], [0, 0, 1, 1], [], []>} : vector<8x16xbf16>, vector<16x512xbf16>, vector<8x512xf32> -> vector<8x512xf32>
    %8 = arith.addf %6, %7 : vector<8x512xf32>
    %c0_4 = arith.constant 0 : index
    %c0_5 = arith.constant 0 : index
    %9 = vector.load %arg3[%c0_4, %c0_5] : memref<1x512xf32, #tpu.memory_space<vmem>>, vector<1x512xf32>
    %10 = vector.broadcast %9 : vector<1x512xf32> to vector<8x512xf32>
    %11 = arith.mulf %8, %10 : vector<8x512xf32>
    %c0_6 = arith.constant 0 : index
    %c0_7 = arith.constant 0 : index
    %12 = vector.load %arg4[%c0_6, %c0_7] : memref<8x512xf32, #tpu.memory_space<vmem>>, vector<8x512xf32>
    tpu.vector_store %arg4[%c0_6, %c0_7], %11 {strides = array<i32>} : memref<8x512xf32, #tpu.memory_space<vmem>>, vector<8x512xf32>,
    return
  }
  func.func @transform_0(%arg0: i32) -> (i32, i32) {
    %c0_i32 = arith.constant 0 : i32
    %c0_i32_0 = arith.constant 0 : i32
    return %arg0, %c0_i32 : i32, i32
  }
  func.func @transform_1(%arg0: i32) -> (i32, i32) {
    %c0_i32 = arith.constant 0 : i32
    %c0_i32_0 = arith.constant 0 : i32
    %c0_i32_1 = arith.constant 0 : i32
    return %c0_i32, %c0_i32_0 : i32, i32
  }
  func.func @transform_2(%arg0: i32) -> (i32, i32) {
    %c0_i32 = arith.constant 0 : i32
    %c0_i32_0 = arith.constant 0 : i32
    %c0_i32_1 = arith.constant 0 : i32
    return %c0_i32, %c0_i32_0 : i32, i32
  }
  func.func @transform_3(%arg0: i32) -> (i32, i32) {
    %c0_i32 = arith.constant 0 : i32
    %c0_i32_0 = arith.constant 0 : i32
    return %arg0, %c0_i32 : i32, i32
  }
}

</mosaic_0001>

<llo_original>
// kernel: tpu_custom_call.1
$region0: #{tpu_custom_call.1}
  #allocation0 [shape = 'u32[]', space=smem, size = 0x4, offset = 0x4, fixed_abs, tag = 'smem constant byte address 0x4 - core index']
  #allocation1 [shape = 'u32[144,128]{1,0:T(1,128)}', space=vmem, size = 0x12000, scoped, tag = 'internal scratch']
  %s0 = inlined_call_operand.hbm [shape: f32[8,16], index: 0, kind: input, shape index: {}]
  %s1 = inlined_call_operand.hbm [shape: bf16[16,512], index: 1, kind: input, shape index: {}]
  %s2 = inlined_call_operand.vmem [shape: f32[1,512], index: 2, kind: input, shape index: {}]
  %s3 = inlined_call_operand.hbm [shape: f32[8,512], index: 3, kind: output, shape index: {}]
  %s4 = sld [smem:[#allocation0]]
  $region30: #{tpu_custom_call.1} parent=0
    _
  %s6 = ssub.s32 1, %s4
  %s7 = scalar_select 0, %s6, %s4
  $region1: #{tpu_custom_call.1} parent=0
    #allocation2 [shape = 'u8[4096]{0}', space=vmem, size = 0x1000, scoped, tag = 'input window, operand 0, single buffered']
    #allocation3 [shape = 's32[1]{0}', space=sflag, size = 0x4, scoped, tag = 'scoped memory for tpu_custom_call.1']
    #allocation4 [shape = 's32[1]{0}', space=sflag, size = 0x4, scoped, tag = 'scoped memory for tpu_custom_call.1']
    #allocation5 [shape = 'u8[16384]{0}', space=vmem, size = 0x4000, scoped, tag = 'input window, operand 1, single buffered']
    #allocation6 [shape = 's32[1]{0}', space=sflag, size = 0x4, scoped, tag = 'scoped memory for tpu_custom_call.1']
    #allocation7 [shape = 'u8[16384]{0}', space=vmem, size = 0x4000, scoped, tag = 'output window, operand 0, single buffered']
    %8 = vsyncpa [#allocation3], 0
    %9 = vsyncpa [#allocation6], 0
    %10 = vsyncpa [#allocation4], 0
    // Predicated region
    $region2: #{tpu_custom_call.1} parent=1 // pred_check
      _
    $region3: #{tpu_custom_call.1} parent=1 // pred_check_branch
      %12 = sbr.rel (0) target = $region5
    $region4: #{tpu_custom_call.1} parent=1 // pred_region
      %s14 = ssub.s32 128, 128
      %15 = vsyncadd [#allocation3], %s14
      %s17 = sshll.u32 [#allocation2], 4
      %s18 = int_to_ptr.vmem [resolvable:$true] %s17
      %20 = dma.hbm_to_vmem [thread:$0]  %s0, 128, %s18, [#allocation3]
    $region5: #{tpu_custom_call.1} parent=1 // pred_fallthru
      _
    // Predicated region
    $region6: #{tpu_custom_call.1} parent=1 // pred_check
      _
    $region7: #{tpu_custom_call.1} parent=1 // pred_check_branch
      %22 = sbr.rel (0) target = $region9
    $region8: #{tpu_custom_call.1} parent=1 // pred_region
      %s24 = ssub.s32 512, 512
      %25 = vsyncadd [#allocation6], %s24
      %s26 = sshll.u32 [#allocation5], 4
      %s27 = int_to_ptr.vmem [resolvable:$true] %s26
      %32 = dma.hbm_to_vmem [thread:$0]  %s1, 512, %s27, [#allocation6], 256, 256, 16
    $region9: #{tpu_custom_call.1} parent=1 // pred_fallthru
      _
    // Predicated region
    $region10: #{tpu_custom_call.1} parent=1 // pred_check
      _
    $region11: #{tpu_custom_call.1} parent=1 // pred_check_branch
      %34 = sbr.rel (0) target = $region13
    $region12: #{tpu_custom_call.1} parent=1 // pred_region
      _
    $region13: #{tpu_custom_call.1} parent=1 // pred_fallthru
      _
    // Predicated region
    $region14: #{tpu_custom_call.1} parent=1 // pred_check
      _
    $region15: #{tpu_custom_call.1} parent=1 // pred_check_branch
      %36 = sbr.rel (0) target = $region17
    $region16: #{tpu_custom_call.1} parent=1 // pred_region
      %37 = dma.done [#allocation3], 128
    $region17: #{tpu_custom_call.1} parent=1 // pred_fallthru
      _
    // Predicated region
    $region18: #{tpu_custom_call.1} parent=1 // pred_check
      _
    $region19: #{tpu_custom_call.1} parent=1 // pred_check_branch
      %39 = sbr.rel (0) target = $region21
    $region20: #{tpu_custom_call.1} parent=1 // pred_region
      %40 = dma.done [#allocation6], 512
    $region21: #{tpu_custom_call.1} parent=1 // pred_fallthru
      _
    %v42 = vld [vmem:[#allocation2] sm:$0xff]
    %v43 = vpack.c.bf16 %v42, %v42
    %v44 = vunpack.c.l.bf16 %v43
    %v45 = vsub.f32 %v42, %v44
    %v46 = vpack.c.bf16 %v45, %v45
    %v47 = vld [vmem:[#allocation5] sm:$0xff]
    %v48 = vld [vmem:[#allocation5 + $0x8] sm:$0xff]
    %v49 = vld [vmem:[#allocation5 + $0x10] sm:$0xff]
    %v50 = vld [vmem:[#allocation5 + $0x18] sm:$0xff]
    %v55 = vunpack.c.l.b16 %v47
    %v56 = vunpack.c.h.b16 %v47
    %v57 = vunpack.c.l.b16 %v48
    %v58 = vunpack.c.h.b16 %v48
    %v59 = vunpack.c.l.b16 %v49
    %v60 = vunpack.c.h.b16 %v49
    %v61 = vunpack.c.l.b16 %v50
    %v62 = vunpack.c.h.b16 %v50
    %v63 = vpack.c.b16 %v59, %v55
    %v64 = vpack.c.b16 %v60, %v56
    %v65 = vpack.c.b16 %v61, %v57
    %v66 = vpack.c.b16 %v62, %v58
    %vm71 = vcmask 130048
    %v73 = vsel %vm71, %v46, 0
    %75 = vmatprep.subr.bf16.mxu0 %v64
    %76 = vmatpush1.bf16.msra.mxu0 %v63
    %77 = vmatprep.subr.bf16.mxu0 0
    %78 = vmatpush1.bf16.msra.mxu0 0
    %79 = vmatprep.subr.bf16.mxu0 0
    %80 = vmatpush1.bf16.msra.mxu0 0
    %81 = vmatprep.subr.bf16.mxu0 0
    %82 = vmatpush1.bf16.msra.mxu0 0
    %83 = vmatprep.subr.bf16.mxu0 0
    %84 = vmatpush1.bf16.msra.mxu0 0
    %85 = vmatprep.subr.bf16.mxu0 0
    %86 = vmatpush1.bf16.msra.mxu0 0
    %87 = vmatprep.subr.bf16.mxu0 0
    %88 = vmatpush1.bf16.msra.mxu0 0
    %89 = vmatprep.subr.bf16.mxu0 0
    %90 = vmatpush1.bf16.msra.mxu0 0
    %91 = vmatprep.subr.bf16.mxu0 0
    %92 = vmatpush1.bf16.msra.mxu0 0
    %93 = vmatprep.subr.bf16.mxu0 0
    %94 = vmatpush1.bf16.msra.mxu0 0
    %95 = vmatprep.subr.bf16.mxu0 0
    %96 = vmatpush1.bf16.msra.mxu0 0
    %97 = vmatprep.subr.bf16.mxu0 0
    %98 = vmatpush1.bf16.msra.mxu0 0
    %99 = vmatprep.subr.bf16.mxu0 0
    %100 = vmatpush1.bf16.msra.mxu0 0
    %101 = vmatprep.subr.bf16.mxu0 0
    %102 = vmatpush1.bf16.msra.mxu0 0
    %103 = vmatprep.subr.bf16.mxu0 0
    %104 = vmatpush1.bf16.msra.mxu0 0
    %105 = vmatprep.subr.bf16.mxu0 0
    %106 = vmatpush1.bf16.msra.mxu0 0
    %107 = vmatprep.mubr.bf16.mxu0 0
    %108 = vmatmul.mubr.bf16.gmra.mrb[0].mxu0 %v73
    %v109 = vpop.f32.mrb[0].mxu0
    %v110 = vadd.f32 0.0, %v109
    %v111 = vpop.f32.mrb[0].mxu0
    %v112 = vadd.f32 0.0, %v111
    %v113 = vpop.f32.mrb[0].mxu0
    %v114 = vpop.f32.mrb[0].mxu0
    %115 = vdwg.mxu0
    %116 = vmatprep.subr.bf16.mxu0 %v66
    %117 = vmatpush1.bf16.msra.mxu0 %v65
    %118 = vmatprep.subr.bf16.mxu0 0
    %119 = vmatpush1.bf16.msra.mxu0 0
    %120 = vmatprep.subr.bf16.mxu0 0
    %121 = vmatpush1.bf16.msra.mxu0 0
    %122 = vmatprep.subr.bf16.mxu0 0
    %123 = vmatpush1.bf16.msra.mxu0 0
    %124 = vmatprep.subr.bf16.mxu0 0
    %125 = vmatpush1.bf16.msra.mxu0 0
    %126 = vmatprep.subr.bf16.mxu0 0
    %127 = vmatpush1.bf16.msra.mxu0 0
    %128 = vmatprep.subr.bf16.mxu0 0
    %129 = vmatpush1.bf16.msra.mxu0 0
    %130 = vmatprep.subr.bf16.mxu0 0
    %131 = vmatpush1.bf16.msra.mxu0 0
    %132 = vmatprep.subr.bf16.mxu0 0
    %133 = vmatpush1.bf16.msra.mxu0 0
    %134 = vmatprep.subr.bf16.mxu0 0
    %135 = vmatpush1.bf16.msra.mxu0 0
    %136 = vmatprep.subr.bf16.mxu0 0
    %137 = vmatpush1.bf16.msra.mxu0 0
    %138 = vmatprep.subr.bf16.mxu0 0
    %139 = vmatpush1.bf16.msra.mxu0 0
    %140 = vmatprep.subr.bf16.mxu0 0
    %141 = vmatpush1.bf16.msra.mxu0 0
    %142 = vmatprep.subr.bf16.mxu0 0
    %143 = vmatpush1.bf16.msra.mxu0 0
    %144 = vmatprep.subr.bf16.mxu0 0
    %145 = vmatpush1.bf16.msra.mxu0 0
    %146 = vmatprep.subr.bf16.mxu0 0
    %147 = vmatpush1.bf16.msra.mxu0 0
    %148 = vmatprep.mubr.bf16.mxu0 0
    %149 = vmatmul.mubr.bf16.gmra.mrb[0].mxu0 %v73
    %v150 = vpop.f32.mrb[0].mxu0
    %v151 = vadd.f32 0.0, %v150
    %v152 = vpop.f32.mrb[0].mxu0
    %v153 = vadd.f32 0.0, %v152
    %v154 = vpop.f32.mrb[0].mxu0
    %v155 = vpop.f32.mrb[0].mxu0
    %156 = vdwg.mxu0
    %v158 = vsel %vm71, %v43, 0
    %160 = vmatprep.subr.bf16.mxu0 %v64
    %161 = vmatpush1.bf16.msra.mxu0 %v63
    %162 = vmatprep.subr.bf16.mxu0 0
    %163 = vmatpush1.bf16.msra.mxu0 0
    %164 = vmatprep.subr.bf16.mxu0 0
    %165 = vmatpush1.bf16.msra.mxu0 0
    %166 = vmatprep.subr.bf16.mxu0 0
    %167 = vmatpush1.bf16.msra.mxu0 0
    %168 = vmatprep.subr.bf16.mxu0 0
    %169 = vmatpush1.bf16.msra.mxu0 0
    %170 = vmatprep.subr.bf16.mxu0 0
    %171 = vmatpush1.bf16.msra.mxu0 0
    %172 = vmatprep.subr.bf16.mxu0 0
    %173 = vmatpush1.bf16.msra.mxu0 0
    %174 = vmatprep.subr.bf16.mxu0 0
    %175 = vmatpush1.bf16.msra.mxu0 0
    %176 = vmatprep.subr.bf16.mxu0 0
    %177 = vmatpush1.bf16.msra.mxu0 0
    %178 = vmatprep.subr.bf16.mxu0 0
    %179 = vmatpush1.bf16.msra.mxu0 0
    %180 = vmatprep.subr.bf16.mxu0 0
    %181 = vmatpush1.bf16.msra.mxu0 0
    %182 = vmatprep.subr.bf16.mxu0 0
    %183 = vmatpush1.bf16.msra.mxu0 0
    %184 = vmatprep.subr.bf16.mxu0 0
    %185 = vmatpush1.bf16.msra.mxu0 0
    %186 = vmatprep.subr.bf16.mxu0 0
    %187 = vmatpush1.bf16.msra.mxu0 0
    %188 = vmatprep.subr.bf16.mxu0 0
    %189 = vmatpush1.bf16.msra.mxu0 0
    %190 = vmatprep.subr.bf16.mxu0 0
    %191 = vmatpush1.bf16.msra.mxu0 0
    %192 = vmatprep.mubr.bf16.mxu0 0
    %193 = vmatmul.mubr.bf16.gmra.mrb[0].mxu0 %v158
    %v194 = vpop.f32.mrb[0].mxu0
    %v195 = vadd.f32 %v110, %v194
    %v196 = vpop.f32.mrb[0].mxu0
    %v197 = vadd.f32 %v112, %v196
    %v198 = vpop.f32.mrb[0].mxu0
    %v199 = vpop.f32.mrb[0].mxu0
    %200 = vdwg.mxu0
    %201 = vmatprep.subr.bf16.mxu0 %v66
    %202 = vmatpush1.bf16.msra.mxu0 %v65
    %203 = vmatprep.subr.bf16.mxu0 0
    %204 = vmatpush1.bf16.msra.mxu0 0
    %205 = vmatprep.subr.bf16.mxu0 0
    %206 = vmatpush1.bf16.msra.mxu0 0
    %207 = vmatprep.subr.bf16.mxu0 0
    %208 = vmatpush1.bf16.msra.mxu0 0
    %209 = vmatprep.subr.bf16.mxu0 0
    %210 = vmatpush1.bf16.msra.mxu0 0
    %211 = vmatprep.subr.bf16.mxu0 0
    %212 = vmatpush1.bf16.msra.mxu0 0
    %213 = vmatprep.subr.bf16.mxu0 0
    %214 = vmatpush1.bf16.msra.mxu0 0
    %215 = vmatprep.subr.bf16.mxu0 0
    %216 = vmatpush1.bf16.msra.mxu0 0
    %217 = vmatprep.subr.bf16.mxu0 0
    %218 = vmatpush1.bf16.msra.mxu0 0
    %219 = vmatprep.subr.bf16.mxu0 0
    %220 = vmatpush1.bf16.msra.mxu0 0
    %221 = vmatprep.subr.bf16.mxu0 0
    %222 = vmatpush1.bf16.msra.mxu0 0
    %223 = vmatprep.subr.bf16.mxu0 0
    %224 = vmatpush1.bf16.msra.mxu0 0
    %225 = vmatprep.subr.bf16.mxu0 0
    %226 = vmatpush1.bf16.msra.mxu0 0
    %227 = vmatprep.subr.bf16.mxu0 0
    %228 = vmatpush1.bf16.msra.mxu0 0
    %229 = vmatprep.subr.bf16.mxu0 0
    %230 = vmatpush1.bf16.msra.mxu0 0
    %231 = vmatprep.subr.bf16.mxu0 0
    %232 = vmatpush1.bf16.msra.mxu0 0
    %233 = vmatprep.mubr.bf16.mxu0 0
    %234 = vmatmul.mubr.bf16.gmra.mrb[0].mxu0 %v158
    %v235 = vpop.f32.mrb[0].mxu0
    %v236 = vadd.f32 %v151, %v235
    %v237 = vpop.f32.mrb[0].mxu0
    %v238 = vadd.f32 %v153, %v237
    %v239 = vpop.f32.mrb[0].mxu0
    %v240 = vpop.f32.mrb[0].mxu0
    %241 = vdwg.mxu0
    %v242 = vld [vmem:[%s2] sm:$0xf]
    %v244 = vlaneseq
    %v245 = vshrl.u32 %v244, 7
    %v246 = vsub.s32 0, %v245
    %v247 = vrot.slane %v242, %v246
    %v248 = vlaneseq
    %v249 = vshrl.u32 %v248, 7
    %v250 = vsub.s32 1, %v249
    %v251 = vrot.slane %v242, %v250
    %v252 = vlaneseq
    %v253 = vshrl.u32 %v252, 7
    %v254 = vsub.s32 2, %v253
    %v255 = vrot.slane %v242, %v254
    %v256 = vlaneseq
    %v257 = vshrl.u32 %v256, 7
    %v258 = vsub.s32 3, %v257
    %v259 = vrot.slane %v242, %v258
    %v264 = vmul.f32 %v195, %v247
    %v265 = vmul.f32 %v197, %v251
    %v266 = vmul.f32 %v236, %v255
    %v267 = vmul.f32 %v238, %v259
    %268 = vst [vmem:[#allocation7] sm:$0xff] %v264
    %269 = vst [vmem:[#allocation7 + $0x8] sm:$0xff] %v265
    %270 = vst [vmem:[#allocation7 + $0x10] sm:$0xff] %v266
    %271 = vst [vmem:[#allocation7 + $0x18] sm:$0xff] %v267
    // Predicated region
    $region22: #{tpu_custom_call.1} parent=1 // pred_check
      _
    $region23: #{tpu_custom_call.1} parent=1 // pred_check_branch
      %273 = sbr.rel (0) target = $region25
    $region24: #{tpu_custom_call.1} parent=1 // pred_region
      %s275 = ssub.s32 512, 512
      %276 = vsyncadd [#allocation4], %s275
      %s278 = sshll.u32 [#allocation7], 4
      %s279 = int_to_ptr.vmem [resolvable:$true] %s278
      %281 = dma.vmem_to_hbm [thread:$0]  %s279, 512, %s3, [#allocation4]
    $region25: #{tpu_custom_call.1} parent=1 // pred_fallthru
      _
    // Predicated region
    $region26: #{tpu_custom_call.1} parent=1 // pred_check
      _
    $region27: #{tpu_custom_call.1} parent=1 // pred_check_branch
      %283 = sbr.rel (0) target = $region29
    $region28: #{tpu_custom_call.1} parent=1 // pred_region
      %284 = dma.done [#allocation4], 512
    $region29: #{tpu_custom_call.1} parent=1 // pred_fallthru
      _
    %285 = vsyncpa [#allocation3], 1
    %286 = vsyncpa [#allocation6], 1
    %287 = vsyncpa [#allocation4], 1

</llo_original>
